<compile_context>
chip_gen: v6e
topology: v6e:2x2x1
jax: 0.10.0
libtpu: 0.0.40
codegen_flags: <defaults>
</compile_context>

<pallas_src>
import functools

import jax
import jax.numpy as jnp
from jax import lax
from jax.experimental import pallas as pl
from jax.experimental.pallas import tpu as pltpu


def _cdiv(a, b):
    return -(-a // b)


def _vmem_capacity_bytes():
    try:
        info = pltpu.get_tpu_info()
        cap = getattr(info, "vmem_capacity_bytes", None)
        if cap:
            return int(cap)
    except Exception:
        pass
    return 128 * 1024 * 1024  # v5e/v6e physical VMEM fallback


def _vmem_budget_bytes():
    # ~3/8 of physical VMEM: ~48 MiB on 128-MiB parts (v5e/v6e), ~24 MiB on v7x.
    return _vmem_capacity_bytes() * 3 // 8


def _pick_tiles(n, d, in_itemsize, budget_bytes):
    """Pick (row, col) tiles so double-buffered 3-input DMA fits the budget."""
    bytes_per_elem = 2 * 3 * in_itemsize  # 2 pipeline buffers x 3 input streams
    # Column (D) tile: keep full rows unless even a 128-row tile would overflow.
    tk_cap = max(128, (budget_bytes // (bytes_per_elem * 128)) // 128 * 128)
    tk = d if d <= tk_cap else tk_cap
    # Row tile: as large as the budget allows, multiple of 128, capped at 2048
    # (>=85% of the HBM roofline already at 1-2K rows x 128+ cols).
    tm = budget_bytes // (bytes_per_elem * tk)
    tm = max(128, (tm // 128) * 128)
    tm = min(tm, 2048)
    # v7x: keep at least 2 row blocks so both TensorCores (and their DMA paths)
    # stream; no effect on single-TC v5e/v6e beyond a still-large tile.
    if n > 256:
        tm = min(tm, 128 * _cdiv(_cdiv(n, 2), 128))
    if n <= tm:
        tm = n  # single full block, no masking needed
    return tm, tk


def _align_ea_kernel(e1_ref, r_ref, e2_ref, o_ref, *, d, tk, mask_d_edge):
    # Input tiles: (tm, tk).  Output tile: (1, tm) float32, resident across the
    # D grid axis (its index map ignores k) -> it IS the accumulator.
    k = pl.program_id(1)

    @pl.when(k == 0)
    def _():
        o_ref[...] = jnp.zeros_like(o_ref)

    # bf16/f32 inputs upcast per-vreg; fuses with the add/sub/mul (no f32 temps).
    diff = (e1_ref[...].astype(jnp.float32)
            + r_ref[...].astype(jnp.float32)
            - e2_ref[...].astype(jnp.float32))
    sq = diff * diff

    if mask_d_edge:
        # Last D block may read past d; zero the padded lanes before reducing.
        valid = jnp.minimum(d - k * tk, tk)
        col = lax.broadcasted_iota(jnp.int32, sq.shape, 1)
        sq = jnp.where(col < valid, sq, 0.0)

    # Lane-dense D-reduction on the otherwise idle MXU:
    #   (1, tk) . (tm, tk)^T -> (1, tm), directly in output layout.
    ones = jnp.ones((1, sq.shape[1]), dtype=jnp.float32)
    part = lax.dot_general(ones, sq,
                           dimension_numbers=(((1,), (1,)), ((), ())),
                           preferred_element_type=jnp.float32)
    o_ref[...] += part


def align_ea_forward(e1, r, e2, *, block_rows=None, block_cols=None,
                     interpret=False):
    """Pallas AlignEA.forward: sum((e1 + r - e2)**2, axis=1) -> f32 shape (N,)."""
    n, d = e1.shape
    assert r.shape == (n, d) and e2.shape == (n, d)
    in_itemsize = max(jnp.dtype(x.dtype).itemsize for x in (e1, r, e2))

    tm, tk = _pick_tiles(n, d, in_itemsize, _vmem_budget_bytes())

    # Validate user overrides: clamp to the array, round to multiples of 128.
    if block_rows is not None:
        tm = n if block_rows >= n else max(128, (block_rows // 128) * 128)
        if tm >= n:
            tm = n
    if block_cols is not None:
        tk = d if block_cols >= d else max(128, (block_cols // 128) * 128)
        if tk >= d:
            tk = d

    grid = (_cdiv(n, tm), _cdiv(d, tk))
    mask_d_edge = (d % tk) != 0

    kernel = functools.partial(_align_ea_kernel, d=d, tk=tk,
                               mask_d_edge=mask_d_edge)

    # Small tiles: a 3rd input buffer hides per-DMA issue latency of 3 streams.
    buffered = pl.Buffered(3) if (tm <= 256 and grid[0] * grid[1] > 2) else None

    def _make_in_spec():
        idx = lambda i, k: (i, k)
        if buffered is not None:
            try:
                return pl.BlockSpec((tm, tk), idx, pipeline_mode=buffered)
            except TypeError:  # jax version without pipeline_mode: fall back
                pass
        return pl.BlockSpec((tm, tk), idx)

    in_spec = _make_in_spec()
    out_spec = pl.BlockSpec((1, tm), lambda i, k: (0, i))  # lane-dense, k-invariant

    num_in_buf = 3 if buffered is not None else 2
    need = (num_in_buf * 3 * tm * tk * in_itemsize     # pipelined input tiles
            + 2 * max(tm, 128) * 4)                    # (1, tm) f32 output blocks
    vmem_limit = int(min(max(need + (4 << 20), 16 << 20),
                         _vmem_capacity_bytes() * 7 // 8))

    out_row = pl.pallas_call(
        kernel,
        out_shape=jax.ShapeDtypeStruct((1, n), jnp.float32),
        grid=grid,
        in_specs=[in_spec, in_spec, in_spec],
        out_specs=out_spec,
        compiler_params=pltpu.CompilerParams(
            dimension_semantics=("parallel", "arbitrary"),
            vmem_limit_bytes=vmem_limit,
        ),
        interpret=interpret,
    )(e1, r, e2)
    return out_row.reshape(n)  # matches torch.sum(..., dim=1) -> shape (N,)
    # TODO(synk): only_pos_loss / loss (logsigmoid + margin hinge) are separate
    # scalar losses in the torch module, not part of forward; not kernelized here.


if __name__ == "__main__":
    # Primary small example: 16 entity pairs, 128-dim embeddings (single block).
    N, D = 16, 128
    k1, k2, k3 = jax.random.split(jax.random.PRNGKey(0), 3)
    e1 = jax.random.normal(k1, (N, D), dtype=jnp.float32)
    r = jax.random.normal(k2, (N, D), dtype=jnp.float32)
    e2 = jax.random.normal(k3, (N, D), dtype=jnp.float32)
    out = jax.block_until_ready(align_ea_forward(e1, r, e2))
    ref = jnp.sum(jnp.square(e1 + r - e2), axis=1)
    assert out.shape == (N,) and out.dtype == jnp.float32
    assert jnp.allclose(out, ref, rtol=1e-5, atol=1e-5)

    # Ragged N, multi row-block path (edge write masking + Buffered(3) small tile).
    N2 = 300
    k4, k5, k6 = jax.random.split(jax.random.PRNGKey(1), 3)
    a = jax.random.normal(k4, (N2, D), dtype=jnp.float32)
    b = jax.random.normal(k5, (N2, D), dtype=jnp.float32)
    c = jax.random.normal(k6, (N2, D), dtype=jnp.float32)
    out2 = jax.block_until_ready(align_ea_forward(a, b, c, block_rows=128))
    ref2 = jnp.sum(jnp.square(a + b - c), axis=1)
    assert out2.shape == (N2,)
    assert jnp.allclose(out2, ref2, rtol=1e-5, atol=1e-5)

    # D-split accumulator path with a ragged D edge (forced small column tile).
    N3, D3 = 64, 320
    k7, k8, k9 = jax.random.split(jax.random.PRNGKey(2), 3)
    x = jax.random.normal(k7, (N3, D3), dtype=jnp.float32)
    y = jax.random.normal(k8, (N3, D3), dtype=jnp.float32)
    z = jax.random.normal(k9, (N3, D3), dtype=jnp.float32)
    out3 = jax.block_until_ready(align_ea_forward(x, y, z, block_cols=128))
    ref3 = jnp.sum(jnp.square(x + y - z), axis=1)
    assert jnp.allclose(out3, ref3, rtol=1e-5, atol=1e-5)

    # bf16 inputs: half the HBM traffic, f32 accumulation AND f32 output.
    a16, b16, c16 = (a.astype(jnp.bfloat16), b.astype(jnp.bfloat16),
                     c.astype(jnp.bfloat16))
    out4 = jax.block_until_ready(align_ea_forward(a16, b16, c16, block_rows=128))
    ref4 = jnp.sum(jnp.square(a16.astype(jnp.float32) + b16.astype(jnp.float32)
                              - c16.astype(jnp.float32)), axis=1)
    assert out4.dtype == jnp.float32
    assert jnp.allclose(out4, ref4, rtol=2e-2, atol=2e-2)

    print("KERNEL_OK")
</pallas_src>

<mosaic_0001>
module attributes {stable_mosaic.version = 11 : i64} {
  func.func @_align_ea_kernel(%arg0: i32, %arg1: i32, %arg2: memref<16x128xf32, #tpu.memory_space<vmem>>, %arg3: memref<16x128xf32, #tpu.memory_space<vmem>>, %arg4: memref<16x128xf32, #tpu.memory_space<vmem>>, %arg5: memref<1x16xf32, #tpu.memory_space<vmem>>) attributes {dimension_semantics = [#tpu.dimension_semantics<parallel>, #tpu.dimension_semantics<arbitrary>], iteration_bounds = array<i64: 1, 1>, scalar_prefetch = 0 : i64, scratch_operands = 0 : i64, tpu.core_type = #tpu.core_type<tc>, window_params = [{transform_indices = @transform_0, window_bounds = array<i64: 16, 128>}, {transform_indices = @transform_1, window_bounds = array<i64: 16, 128>}, {transform_indices = @transform_2, window_bounds = array<i64: 16, 128>}, {transform_indices = @transform_3, window_bounds = array<i64: 1, 16>}]} {
    %c0_i32 = arith.constant 0 : i32
    %0 = arith.cmpi eq, %arg1, %c0_i32 : i32
    %1 = arith.extui %0 : i1 to i32
    %c0_i32_0 = arith.constant 0 : i32
    %2 = arith.cmpi ne, %1, %c0_i32_0 : i32
    scf.if %2 {
      %cst_11 = arith.constant 0.000000e+00 : f32
      %14 = vector.broadcast %cst_11 : f32 to vector<1x16xf32>
      %c0_12 = arith.constant 0 : index
      %c0_13 = arith.constant 0 : index
      %15 = vector.load %arg5[%c0_12, %c0_13] : memref<1x16xf32, #tpu.memory_space<vmem>>, vector<1x16xf32>
      tpu.vector_store %arg5[%c0_12, %c0_13], %14 {strides = array<i32>} : memref<1x16xf32, #tpu.memory_space<vmem>>, vector<1x16xf32>,
    } else {
    }
    %c0 = arith.constant 0 : index
    %c0_1 = arith.constant 0 : index
    %3 = vector.load %arg2[%c0, %c0_1] : memref<16x128xf32, #tpu.memory_space<vmem>>, vector<16x128xf32>
    %c0_2 = arith.constant 0 : index
    %c0_3 = arith.constant 0 : index
    %4 = vector.load %arg3[%c0_2, %c0_3] : memref<16x128xf32, #tpu.memory_space<vmem>>, vector<16x128xf32>
    %5 = arith.addf %3, %4 : vector<16x128xf32>
    %c0_4 = arith.constant 0 : index
    %c0_5 = arith.constant 0 : index
    %6 = vector.load %arg4[%c0_4, %c0_5] : memref<16x128xf32, #tpu.memory_space<vmem>>, vector<16x128xf32>
    %7 = arith.subf %5, %6 : vector<16x128xf32>
    %8 = arith.mulf %7, %7 : vector<16x128xf32>
    %cst = arith.constant 1.000000e+00 : f32
    %9 = vector.broadcast %cst : f32 to vector<1x128xf32>
    %cst_6 = arith.constant dense<0.000000e+00> : vector<1x16xf32>
    %10 = tpu.matmul %9, %8, %cst_6 {dimension_numbers = #tpu.dot_dimension_numbers<[1], [1], [0], [0], [0, 0, 1, 0], [], []>} : vector<1x128xf32>, vector<16x128xf32>, vector<1x16xf32> -> vector<1x16xf32>
    %c0_7 = arith.constant 0 : index
    %c0_8 = arith.constant 0 : index
    %11 = vector.load %arg5[%c0_7, %c0_8] : memref<1x16xf32, #tpu.memory_space<vmem>>, vector<1x16xf32>
    %12 = arith.addf %11, %10 : vector<1x16xf32>
    %c0_9 = arith.constant 0 : index
    %c0_10 = arith.constant 0 : index
    %13 = vector.load %arg5[%c0_9, %c0_10] : memref<1x16xf32, #tpu.memory_space<vmem>>, vector<1x16xf32>
    tpu.vector_store %arg5[%c0_9, %c0_10], %12 {strides = array<i32>} : memref<1x16xf32, #tpu.memory_space<vmem>>, vector<1x16xf32>,
    return
  }
  func.func @transform_0(%arg0: i32, %arg1: i32) -> (i32, i32) {
    %c0_i32 = arith.constant 0 : i32
    return %arg0, %arg1 : i32, i32
  }
  func.func @transform_1(%arg0: i32, %arg1: i32) -> (i32, i32) {
    %c0_i32 = arith.constant 0 : i32
    return %arg0, %arg1 : i32, i32
  }
  func.func @transform_2(%arg0: i32, %arg1: i32) -> (i32, i32) {
    %c0_i32 = arith.constant 0 : i32
    return %arg0, %arg1 : i32, i32
  }
  func.func @transform_3(%arg0: i32, %arg1: i32) -> (i32, i32) {
    %c0_i32 = arith.constant 0 : i32
    %c0_i32_0 = arith.constant 0 : i32
    return %c0_i32, %arg0 : i32, i32
  }
}

</mosaic_0001>

<llo_original>
// kernel: tpu_custom_call.1
$region0: #{tpu_custom_call.1}
  #allocation0 [shape = 'u32[]', space=smem, size = 0x4, offset = 0x4, fixed_abs, tag = 'smem constant byte address 0x4 - core index']
  #allocation1 [shape = 'u32[144,128]{1,0:T(1,128)}', space=vmem, size = 0x12000, scoped, tag = 'internal scratch']
  %s0 = inlined_call_operand.hbm [shape: f32[16,128], index: 0, kind: input, shape index: {}]
  %s1 = inlined_call_operand.hbm [shape: f32[16,128], index: 1, kind: input, shape index: {}]
  %s2 = inlined_call_operand.hbm [shape: f32[16,128], index: 2, kind: input, shape index: {}]
  %s3 = inlined_call_operand.hbm [shape: f32[1,16], index: 3, kind: output, shape index: {}]
  %s4 = sld [smem:[#allocation0]]
  $region38: #{tpu_custom_call.1} parent=0
    _
  %s6 = ssub.s32 1, %s4
  %s7 = scalar_select 0, %s6, %s4
  $region1: #{tpu_custom_call.1} parent=0
    #allocation2 [shape = 'u8[8192]{0}', space=vmem, size = 0x2000, scoped, tag = 'input window, operand 0, single buffered']
    #allocation3 [shape = 's32[1]{0}', space=sflag, size = 0x4, scoped, tag = 'scoped memory for tpu_custom_call.1']
    #allocation4 [shape = 's32[1]{0}', space=sflag, size = 0x4, scoped, tag = 'scoped memory for tpu_custom_call.1']
    #allocation5 [shape = 'u8[8192]{0}', space=vmem, size = 0x2000, scoped, tag = 'input window, operand 1, single buffered']
    #allocation6 [shape = 's32[1]{0}', space=sflag, size = 0x4, scoped, tag = 'scoped memory for tpu_custom_call.1']
    #allocation7 [shape = 'u8[8192]{0}', space=vmem, size = 0x2000, scoped, tag = 'input window, operand 2, single buffered']
    #allocation8 [shape = 'u8[512]{0}', space=vmem, size = 0x400, scoped, tag = 'output window, operand 0, single buffered']
    %8 = vsyncpa [#allocation3], 0
    %9 = vsyncpa [#allocation6], 0
    %10 = vsyncpa [#allocation4], 0
    // Predicated region
    $region2: #{tpu_custom_call.1} parent=1 // pred_check
      _
    $region3: #{tpu_custom_call.1} parent=1 // pred_check_branch
      %12 = sbr.rel (0) target = $region5
    $region4: #{tpu_custom_call.1} parent=1 // pred_region
      %s14 = ssub.s32 256, 256
      %15 = vsyncadd [#allocation3], %s14
      %s16 = sshll.u32 [#allocation2], 4
      %s17 = int_to_ptr.vmem [resolvable:$true] %s16
      %22 = dma.hbm_to_vmem [thread:$0]  %s0, 256, %s17, [#allocation3], 128, 128, 8
    $region5: #{tpu_custom_call.1} parent=1 // pred_fallthru
      _
    // Predicated region
    $region6: #{tpu_custom_call.1} parent=1 // pred_check
      _
    $region7: #{tpu_custom_call.1} parent=1 // pred_check_branch
      %24 = sbr.rel (0) target = $region9
    $region8: #{tpu_custom_call.1} parent=1 // pred_region
      %s26 = ssub.s32 256, 256
      %27 = vsyncadd [#allocation6], %s26
      %s28 = sshll.u32 [#allocation5], 4
      %s29 = int_to_ptr.vmem [resolvable:$true] %s28
      %34 = dma.hbm_to_vmem [thread:$0]  %s1, 256, %s29, [#allocation6], 128, 128, 8
    $region9: #{tpu_custom_call.1} parent=1 // pred_fallthru
      _
    // Predicated region
    $region10: #{tpu_custom_call.1} parent=1 // pred_check
      _
    $region11: #{tpu_custom_call.1} parent=1 // pred_check_branch
      %36 = sbr.rel (0) target = $region13
    $region12: #{tpu_custom_call.1} parent=1 // pred_region
      %s38 = ssub.s32 256, 256
      %39 = vsyncadd [#allocation6], %s38
      %s40 = sshll.u32 [#allocation7], 4
      %s41 = int_to_ptr.vmem [resolvable:$true] %s40
      %46 = dma.hbm_to_vmem [thread:$0]  %s2, 256, %s41, [#allocation6], 128, 128, 8
    $region13: #{tpu_custom_call.1} parent=1 // pred_fallthru
      _
    // Predicated region
    $region14: #{tpu_custom_call.1} parent=1 // pred_check
      _
    $region15: #{tpu_custom_call.1} parent=1 // pred_check_branch
      %48 = sbr.rel (0) target = $region17
    $region16: #{tpu_custom_call.1} parent=1 // pred_region
      %49 = dma.done [#allocation3], 256
    $region17: #{tpu_custom_call.1} parent=1 // pred_fallthru
      _
    // Predicated region
    $region18: #{tpu_custom_call.1} parent=1 // pred_check
      _
    $region19: #{tpu_custom_call.1} parent=1 // pred_check_branch
      %51 = sbr.rel (0) target = $region21
    $region20: #{tpu_custom_call.1} parent=1 // pred_region
      %52 = dma.done [#allocation6], 256
    $region21: #{tpu_custom_call.1} parent=1 // pred_fallthru
      _
    // Predicated region
    $region22: #{tpu_custom_call.1} parent=1 // pred_check
      _
    $region23: #{tpu_custom_call.1} parent=1 // pred_check_branch
      %54 = sbr.rel (0) target = $region25
    $region24: #{tpu_custom_call.1} parent=1 // pred_region
      %55 = dma.done [#allocation6], 256
    $region25: #{tpu_custom_call.1} parent=1 // pred_fallthru
      _
    %p56 = scmp.eq.s32.totalorder 0, 0
    // Predicated region
    $region26: #{tpu_custom_call.1} parent=1 // pred_check
      %p57 = pneg %p56
    $region27: #{tpu_custom_call.1} parent=1 // pred_check_branch
      %59 = sbr.rel (%p57) target = $region29
    $region28: #{tpu_custom_call.1} parent=1 // pred_region
      %vm60 = vcmask 122880
      %61 = vst.msk [vmem:[#allocation8] sm:$0x1] %vm60, 0.0
    $region29: #{tpu_custom_call.1} parent=1 // pred_fallthru
      _
    %v62 = vld [vmem:[#allocation2] sm:$0xff]
    %v63 = vld [vmem:[#allocation2 + $0x8] sm:$0xff]
    %v64 = vld [vmem:[#allocation5] sm:$0xff]
    %v65 = vld [vmem:[#allocation5 + $0x8] sm:$0xff]
    %v66 = vadd.f32 %v62, %v64
    %v67 = vadd.f32 %v63, %v65
    %v68 = vld [vmem:[#allocation7] sm:$0xff]
    %v69 = vld [vmem:[#allocation7 + $0x8] sm:$0xff]
    %v70 = vsub.f32 %v66, %v68
    %v71 = vsub.f32 %v67, %v69
    %v72 = vmul.f32 %v70, %v70
    %v73 = vmul.f32 %v71, %v71
    %74 = vmatprep.subr.mxu0 0.0
    %75 = vmatpush1.xpose.msra.mxu0 0.0
    %76 = vmatprep.subr.mxu0 0.0
    %77 = vmatpush1.xpose.msra.mxu0 0.0
    %78 = vmatprep.subr.mxu0 0.0
    %79 = vmatpush1.xpose.msra.mxu0 0.0
    %80 = vmatprep.subr.mxu0 0.0
    %81 = vmatpush1.xpose.msra.mxu0 0.0
    %82 = vmatprep.subr.mxu0 0.0
    %83 = vmatpush1.xpose.msra.mxu0 0.0
    %84 = vmatprep.subr.mxu0 0.0
    %85 = vmatpush1.xpose.msra.mxu0 0.0
    %86 = vmatprep.subr.mxu0 0.0
    %87 = vmatpush1.xpose.msra.mxu0 0.0
    %88 = vmatprep.subr.mxu0 0.0
    %89 = vmatpush1.xpose.msra.mxu0 0.0
    %90 = vmatprep.subr.mxu0 0.0
    %91 = vmatpush1.xpose.msra.mxu0 0.0
    %92 = vmatprep.subr.mxu0 0.0
    %93 = vmatpush1.xpose.msra.mxu0 0.0
    %94 = vmatprep.subr.mxu0 0.0
    %95 = vmatpush1.xpose.msra.mxu0 0.0
    %96 = vmatprep.subr.mxu0 0.0
    %97 = vmatpush1.xpose.msra.mxu0 0.0
    %98 = vmatprep.subr.mxu0 0.0
    %99 = vmatpush1.xpose.msra.mxu0 0.0
    %100 = vmatprep.subr.mxu0 0.0
    %101 = vmatpush1.xpose.msra.mxu0 0.0
    %102 = vmatprep.subr.mxu0 0.0
    %103 = vmatpush1.xpose.msra.mxu0 %v73
    %104 = vmatprep.subr.mxu0 0.0
    %105 = vmatpush1.xpose.msra.mxu0 %v72
    %106 = vmatprep.subr.mxu0 0.0
    %107 = vmatpush2.xpose.msra.mxu0 0.0
    %108 = vmatprep.subr.mxu0 0.0
    %109 = vmatpush2.xpose.msra.mxu0 0.0
    %110 = vmatprep.subr.mxu0 0.0
    %111 = vmatpush2.xpose.msra.mxu0 0.0
    %112 = vmatprep.subr.mxu0 0.0
    %113 = vmatpush2.xpose.msra.mxu0 0.0
    %114 = vmatprep.subr.mxu0 0.0
    %115 = vmatpush2.xpose.msra.mxu0 0.0
    %116 = vmatprep.subr.mxu0 0.0
    %117 = vmatpush2.xpose.msra.mxu0 0.0
    %118 = vmatprep.subr.mxu0 0.0
    %119 = vmatpush2.xpose.msra.mxu0 0.0
    %120 = vmatprep.subr.mxu0 0.0
    %121 = vmatpush2.xpose.msra.mxu0 0.0
    %122 = vmatprep.subr.mxu0 0.0
    %123 = vmatpush2.xpose.msra.mxu0 0.0
    %124 = vmatprep.subr.mxu0 0.0
    %125 = vmatpush2.xpose.msra.mxu0 0.0
    %126 = vmatprep.subr.mxu0 0.0
    %127 = vmatpush2.xpose.msra.mxu0 0.0
    %128 = vmatprep.subr.mxu0 0.0
    %129 = vmatpush2.xpose.msra.mxu0 0.0
    %130 = vmatprep.subr.mxu0 0.0
    %131 = vmatpush2.xpose.msra.mxu0 0.0
    %132 = vmatprep.subr.mxu0 0.0
    %133 = vmatpush2.xpose.msra.mxu0 0.0
    %134 = vmatprep.subr.mxu0 0.0
    %135 = vmatpush2.xpose.msra.mxu0 0.0
    %136 = vmatprep.subr.mxu0 0.0
    %137 = vmatpush2.xpose.msra.mxu0 0.0
    %138 = vmatprep.mubr.f32.mxu0 0.0
    %139 = vmatmul.mubr.f32.gmra.mxu0 1.0
    %v140 = vpop.f32.mrf.mxu0
    %v141 = vadd.f32 0.0, %v140
    %v142 = vpop.f32.mrf.mxu0
    %143 = vdwg.mxu0
    %v144 = vld [vmem:[#allocation8] sm:$0x1]
    %v145 = vadd.f32 %v144, %v141
    %vm146 = vcmask 122880
    %147 = vst.msk [vmem:[#allocation8] sm:$0x1] %vm146, %v145
    // Predicated region
    $region30: #{tpu_custom_call.1} parent=1 // pred_check
      _
    $region31: #{tpu_custom_call.1} parent=1 // pred_check_branch
      %149 = sbr.rel (0) target = $region33
    $region32: #{tpu_custom_call.1} parent=1 // pred_region
      %s151 = ssub.s32 16, 16
      %152 = vsyncadd [#allocation4], %s151
      %s154 = sshll.u32 [#allocation8], 4
      %s155 = int_to_ptr.vmem [resolvable:$true] %s154
      %157 = dma.vmem_to_hbm [thread:$0]  %s155, 16, %s3, [#allocation4]
    $region33: #{tpu_custom_call.1} parent=1 // pred_fallthru
      _
    // Predicated region
    $region34: #{tpu_custom_call.1} parent=1 // pred_check
      _
    $region35: #{tpu_custom_call.1} parent=1 // pred_check_branch
      %159 = sbr.rel (0) target = $region37
    $region36: #{tpu_custom_call.1} parent=1 // pred_region
      %160 = dma.done [#allocation4], 16
    $region37: #{tpu_custom_call.1} parent=1 // pred_fallthru
      _
    %161 = vsyncpa [#allocation3], 1
    %162 = vsyncpa [#allocation6], 1
    %163 = vsyncpa [#allocation4], 1

</llo_original>
